<compile_context>
chip_gen: v5e
topology: v5e:2x2
jax: 0.10.0
libtpu: 0.0.40
codegen_flags: <defaults>
</compile_context>

<pallas_src>
import functools

import jax
import jax.numpy as jnp
from jax.experimental import pallas as pl
from jax.experimental.pallas import tpu as pltpu

_TOKEN_TILE = 256                 # token-axis tile (multiple of 8)
_VMEM_LIMIT = 32 * 1024 * 1024    # fits v7x (64 MiB physical) and v5e/v6e
_LN_EPS = 1e-5


def _cparams(n_parallel_axes=1):
    return pltpu.CompilerParams(
        dimension_semantics=("parallel",) * n_parallel_axes,
        vmem_limit_bytes=_VMEM_LIMIT)


def _token_tile(n):
    return n if n <= _TOKEN_TILE else _TOKEN_TILE


def _gelu(x):
    # tanh-approx GELU -> tanh on EUP slot (nearly free next to MXU/VPU work).
    # TODO(synk): PyTorch nn.GELU() is exact-erf; tanh approx differs ~1e-3 rel.
    return jax.nn.gelu(x, approximate=True)


def _ln(x, g, b, eps=_LN_EPS):
    mu = jnp.mean(x, axis=-1, keepdims=True)
    xc = x - mu
    var = jnp.mean(xc * xc, axis=-1, keepdims=True)
    return xc * jax.lax.rsqrt(var + eps) * g + b


# ----------------------------------------------------------------------------
# Pallas kernels
# ----------------------------------------------------------------------------
def _linear_ln_kernel(x_ref, w_ref, b_ref, g_ref, beta_ref, o_ref):
    """PatchEmbed: y = x @ w + b ; LayerNorm(y)."""
    y = jnp.dot(x_ref[...].astype(jnp.bfloat16), w_ref[...],
                preferred_element_type=jnp.float32) + b_ref[...]
    o_ref[...] = _ln(y, g_ref[...], beta_ref[...]).astype(o_ref.dtype)


def _ln_linear_kernel(x_ref, g_ref, beta_ref, w_ref, b_ref, o_ref):
    """FocalNetBlock front: xn = norm1(x) ; xf = xn @ f_w + f_b."""
    xn = _ln(x_ref[...].astype(jnp.float32), g_ref[...], beta_ref[...])
    y = jnp.dot(xn.astype(jnp.bfloat16), w_ref[...],
                preferred_element_type=jnp.float32) + b_ref[...]
    o_ref[...] = y.astype(o_ref.dtype)


def _focal_level_kernel(*refs, k, H, W, level, n_levels, first, last):
    """Depthwise conv(k,same) + GELU + gated accumulation (+ global gate)."""
    ctx_pad_ref, w_ref, gates_ref = refs[:3]
    idx = 3
    if not first:
        ctx_all_in_ref = refs[idx]
        idx += 1
    if last:
        ctx_all_out_ref = refs[idx]
        ctx_out_ref = None
    else:
        ctx_out_ref, ctx_all_out_ref = refs[idx], refs[idx + 1]

    x = ctx_pad_ref[...].astype(jnp.float32)        # (1, H+2p, W+2p, C)
    w = w_ref[...].astype(jnp.float32)              # (k, k, C)
    C = x.shape[-1]

    acc = jnp.zeros((1, H, W, C), jnp.float32)
    for dy in range(k):
        for dx in range(k):
            tap = w[dy, dx, :]                      # (C,), hoisted per tap
            acc = acc + x[:, dy:dy + H, dx:dx + W, :] * tap
    ctx_new = _gelu(acc)                            # (1, H, W, C)

    gates = gates_ref[...].astype(jnp.float32)      # (1, H, W, L+1)
    term = ctx_new * gates[..., level:level + 1]
    if first:
        ctx_all = term
    else:
        ctx_all = ctx_all_in_ref[...].astype(jnp.float32) + term

    if last:
        # fused global context: GELU(mean over H,W) * last gate
        ctx_g = _gelu(jnp.mean(ctx_new, axis=(1, 2), keepdims=True))
        ctx_all = ctx_all + ctx_g * gates[..., n_levels:n_levels + 1]
    else:
        ctx_out_ref[...] = ctx_new.astype(ctx_out_ref.dtype)
    ctx_all_out_ref[...] = ctx_all.astype(ctx_all_out_ref.dtype)


def _modulate_proj_kernel(q_ref, ctx_ref, sc_ref, hw_ref, hb_ref,
                          pw_ref, pb_ref, o_ref):
    """modulator = h(ctx_all); x = shortcut + proj(q * modulator)."""
    mod = jnp.dot(ctx_ref[...].astype(jnp.bfloat16), hw_ref[...],
                  preferred_element_type=jnp.float32) + hb_ref[...]
    xo = q_ref[...].astype(jnp.float32) * mod
    y = jnp.dot(xo.astype(jnp.bfloat16), pw_ref[...],
                preferred_element_type=jnp.float32) + pb_ref[...]
    o_ref[...] = (sc_ref[...].astype(jnp.float32) + y).astype(o_ref.dtype)


def _mlp_block_kernel(x_ref, g_ref, beta_ref, w1_ref, b1_ref,
                      w2_ref, b2_ref, o_ref):
    """x + fc2(GELU(fc1(norm2(x)))) fused."""
    x = x_ref[...].astype(jnp.float32)
    xn = _ln(x, g_ref[...], beta_ref[...])
    h = jnp.dot(xn.astype(jnp.bfloat16), w1_ref[...],
                preferred_element_type=jnp.float32) + b1_ref[...]
    h = _gelu(h)
    y = jnp.dot(h.astype(jnp.bfloat16), w2_ref[...],
                preferred_element_type=jnp.float32) + b2_ref[...]
    o_ref[...] = (x + y).astype(o_ref.dtype)


def _norm_pool_kernel(x_ref, g_ref, b_ref, o_ref):
    """Final LayerNorm + mean over tokens (AdaptiveAvgPool1d(1))."""
    xn = _ln(x_ref[...].astype(jnp.float32), g_ref[...], b_ref[...])  # (1,L,C)
    o_ref[...] = jnp.mean(xn, axis=1, keepdims=True).astype(o_ref.dtype)


# ----------------------------------------------------------------------------
# pallas_call wrappers (tiled grids)
# ----------------------------------------------------------------------------
def linear_ln(x, w, b, g, beta):
    N, Cin = x.shape
    Cout = w.shape[1]
    tn = _token_tile(N)
    return pl.pallas_call(
        _linear_ln_kernel,
        grid=(pl.cdiv(N, tn),),
        in_specs=[
            pl.BlockSpec((tn, Cin), lambda i: (i, 0)),
            pl.BlockSpec((Cin, Cout), lambda i: (0, 0)),
            pl.BlockSpec((1, Cout), lambda i: (0, 0)),
            pl.BlockSpec((1, Cout), lambda i: (0, 0)),
            pl.BlockSpec((1, Cout), lambda i: (0, 0)),
        ],
        out_specs=pl.BlockSpec((tn, Cout), lambda i: (i, 0)),
        out_shape=jax.ShapeDtypeStruct((N, Cout), x.dtype),
        compiler_params=_cparams(1),
    )(x, w.astype(jnp.bfloat16), b.reshape(1, Cout),
      g.reshape(1, Cout), beta.reshape(1, Cout))


def ln_linear(x, g, beta, w, b):
    N, C = x.shape
    Cout = w.shape[1]
    tn = _token_tile(N)
    return pl.pallas_call(
        _ln_linear_kernel,
        grid=(pl.cdiv(N, tn),),
        in_specs=[
            pl.BlockSpec((tn, C), lambda i: (i, 0)),
            pl.BlockSpec((1, C), lambda i: (0, 0)),
            pl.BlockSpec((1, C), lambda i: (0, 0)),
            pl.BlockSpec((C, Cout), lambda i: (0, 0)),
            pl.BlockSpec((1, Cout), lambda i: (0, 0)),
        ],
        out_specs=pl.BlockSpec((tn, Cout), lambda i: (i, 0)),
        out_shape=jax.ShapeDtypeStruct((N, Cout), x.dtype),
        compiler_params=_cparams(1),
    )(x, g.reshape(1, C), beta.reshape(1, C),
      w.astype(jnp.bfloat16), b.reshape(1, Cout))


def focal_level_step(ctx, w, gates, ctx_all, *, level, n_levels):
    """One focal level: dwconv+GELU, gate-accumulate into ctx_all.
    Last level also fuses the global-context gate."""
    B, H, W, C = ctx.shape
    k = w.shape[0]
    p = k // 2
    # TODO(synk): halo padding done with jnp.pad outside the kernel (one extra HBM pass).
    ctx_pad = jnp.pad(ctx, ((0, 0), (p, p), (p, p), (0, 0)))
    first = level == 0
    last = level == n_levels - 1
    Hp, Wp = H + 2 * p, W + 2 * p
    Lg = gates.shape[-1]

    def img_spec():
        return pl.BlockSpec((1, H, W, C), lambda b: (b, 0, 0, 0))

    inputs = [ctx_pad, w, gates]
    in_specs = [
        pl.BlockSpec((1, Hp, Wp, C), lambda b: (b, 0, 0, 0)),
        pl.BlockSpec((k, k, C), lambda b: (0, 0, 0)),
        pl.BlockSpec((1, H, W, Lg), lambda b: (b, 0, 0, 0)),
    ]
    if not first:
        inputs.append(ctx_all)
        in_specs.append(img_spec())

    shp = jax.ShapeDtypeStruct((B, H, W, C), ctx.dtype)
    if last:
        out_specs = img_spec()
        out_shape = shp
    else:
        out_specs = (img_spec(), img_spec())
        out_shape = (shp, shp)

    out = pl.pallas_call(
        functools.partial(_focal_level_kernel, k=k, H=H, W=W, level=level,
                          n_levels=n_levels, first=first, last=last),
        grid=(B,),
        in_specs=in_specs,
        out_specs=out_specs,
        out_shape=out_shape,
        compiler_params=_cparams(1),
    )(*inputs)
    if last:
        return None, out
    return out  # (ctx_new, ctx_all)


def modulate_proj_residual(q, ctx_all, shortcut, h_w, h_b, p_w, p_b):
    N, C = q.shape
    tn = _token_tile(N)
    tok = pl.BlockSpec((tn, C), lambda i: (i, 0))
    mat = pl.BlockSpec((C, C), lambda i: (0, 0))
    vec = pl.BlockSpec((1, C), lambda i: (0, 0))
    return pl.pallas_call(
        _modulate_proj_kernel,
        grid=(pl.cdiv(N, tn),),
        in_specs=[tok, tok, tok, mat, vec, mat, vec],
        out_specs=pl.BlockSpec((tn, C), lambda i: (i, 0)),
        out_shape=jax.ShapeDtypeStruct((N, C), q.dtype),
        compiler_params=_cparams(1),
    )(q, ctx_all, shortcut,
      h_w.astype(jnp.bfloat16), h_b.reshape(1, C),
      p_w.astype(jnp.bfloat16), p_b.reshape(1, C))


def mlp_residual(x, g, beta, w1, b1, w2, b2):
    N, C = x.shape
    Hd = w1.shape[1]
    tn = _token_tile(N)
    return pl.pallas_call(
        _mlp_block_kernel,
        grid=(pl.cdiv(N, tn),),
        in_specs=[
            pl.BlockSpec((tn, C), lambda i: (i, 0)),
            pl.BlockSpec((1, C), lambda i: (0, 0)),
            pl.BlockSpec((1, C), lambda i: (0, 0)),
            pl.BlockSpec((C, Hd), lambda i: (0, 0)),
            pl.BlockSpec((1, Hd), lambda i: (0, 0)),
            pl.BlockSpec((Hd, C), lambda i: (0, 0)),
            pl.BlockSpec((1, C), lambda i: (0, 0)),
        ],
        out_specs=pl.BlockSpec((tn, C), lambda i: (i, 0)),
        out_shape=jax.ShapeDtypeStruct((N, C), x.dtype),
        compiler_params=_cparams(1),
    )(x, g.reshape(1, C), beta.reshape(1, C),
      w1.astype(jnp.bfloat16), b1.reshape(1, Hd),
      w2.astype(jnp.bfloat16), b2.reshape(1, C))


def norm_pool(x, g, b):
    B, L, C = x.shape
    out = pl.pallas_call(
        _norm_pool_kernel,
        grid=(B,),
        in_specs=[
            pl.BlockSpec((1, L, C), lambda i: (i, 0, 0)),
            pl.BlockSpec((1, C), lambda i: (0, 0)),
            pl.BlockSpec((1, C), lambda i: (0, 0)),
        ],
        out_specs=pl.BlockSpec((1, 1, C), lambda i: (i, 0, 0)),
        out_shape=jax.ShapeDtypeStruct((B, 1, C), x.dtype),
        compiler_params=_cparams(1),
    )(x, g.reshape(1, C), b.reshape(1, C))
    return out.reshape(B, C)


# ----------------------------------------------------------------------------
# model glue (reshapes / parameter plumbing stay in plain JAX)
# ----------------------------------------------------------------------------
def patch_embed(x_nhwc, p, w, b, g, beta):
    """Non-overlapping conv (kernel=stride=p) as a matmul, fused with LN."""
    B, H, W, Cin = x_nhwc.shape
    Hp, Wp = H // p, W // p
    xr = (x_nhwc.reshape(B, Hp, p, Wp, p, Cin)
          .transpose(0, 1, 3, 2, 4, 5)
          .reshape(B * Hp * Wp, p * p * Cin))
    y = linear_ln(xr, w, b, g, beta)
    return y.reshape(B, Hp * Wp, w.shape[1]), Hp, Wp


def focalnet_block(x, H, W, bp, focal_level):
    B, L, C = x.shape
    N = B * L
    mp = bp["mod"]

    # fused norm1 + f-projection
    xf = ln_linear(x.reshape(N, C), bp["norm1_g"], bp["norm1_b"],
                   mp["f_w"], mp["f_b"])
    xf = xf.reshape(B, H, W, 2 * C + focal_level + 1)
    q = xf[..., :C]
    ctx = xf[..., C:2 * C]
    gates = xf[..., 2 * C:]

    # focal levels: dwconv + GELU + gated accumulation (+ fused global ctx)
    ctx_all = None
    for l in range(focal_level):
        ctx, ctx_all = focal_level_step(ctx, mp["focal_w"][l], gates, ctx_all,
                                        level=l, n_levels=focal_level)

    # fused h(1x1) + q*modulator + proj + residual add
    x = modulate_proj_residual(q.reshape(N, C), ctx_all.reshape(N, C),
                               x.reshape(N, C),
                               mp["h_w"], mp["h_b"], mp["proj_w"], mp["proj_b"])
    x = x.reshape(B, L, C)

    # fused norm2 + MLP + residual add
    x = mlp_residual(x.reshape(N, C), bp["norm2_g"], bp["norm2_b"],
                     bp["fc1_w"], bp["fc1_b"], bp["fc2_w"], bp["fc2_b"])
    return x.reshape(B, L, C)


def focalnet_forward(x_nchw, params, cfg):
    # NCHW (PyTorch) -> NHWC (kernel layout)
    x = jnp.transpose(x_nchw, (0, 2, 3, 1))
    x, H, W = patch_embed(x, cfg["patch_size"], params["pe_w"], params["pe_b"],
                          params["pe_norm_g"], params["pe_norm_b"])
    # pos_drop / proj_drop / drop_path are identity (rate 0 / eval mode)
    for i, stage in enumerate(params["stages"]):
        for blk in stage["blocks"]:
            x = focalnet_block(x, H, W, blk, cfg["focal_levels"][i])
        if stage["down"] is not None:
            B, L, C = x.shape
            x_img = x.reshape(B, H, W, C)
            d = stage["down"]
            x, H, W = patch_embed(x_img, 2, d["w"], d["b"], d["norm_g"], d["norm_b"])
    # fused final LayerNorm + avg-pool over tokens -> (B, num_features)
    return norm_pool(x, params["norm_g"], params["norm_b"])


# ----------------------------------------------------------------------------
# deterministic parameter construction (shapes follow the PyTorch __init__)
# ----------------------------------------------------------------------------
def init_params(key, cfg):
    dims = [cfg["embed_dim"] * 2 ** i for i in range(len(cfg["depths"]))]
    keys = iter(jax.random.split(key, 512))

    def nrm(shape, std=0.02):
        return (std * jax.random.normal(next(keys), shape)).astype(jnp.float32)

    def zeros(n):
        return jnp.zeros((n,), jnp.float32)

    def ones(n):
        return jnp.ones((n,), jnp.float32)

    p = {}
    pin = cfg["patch_size"] ** 2 * cfg["in_chans"]
    p["pe_w"] = nrm((pin, dims[0]))
    p["pe_b"] = zeros(dims[0])
    p["pe_norm_g"] = ones(dims[0])
    p["pe_norm_b"] = zeros(dims[0])

    stages = []
    for i, depth in enumerate(cfg["depths"]):
        dim = dims[i]
        L = cfg["focal_levels"][i]
        fw = cfg["focal_windows"][i]
        hidden = int(dim * cfg["mlp_ratio"])
        blocks = []
        for _ in range(depth):
            mod = {
                "f_w": nrm((dim, 2 * dim + L + 1)),
                "f_b": zeros(2 * dim + L + 1),
                "focal_w": [nrm((cfg["focal_factor"] * k + fw,
                                 cfg["focal_factor"] * k + fw, dim)) for k in range(L)],
                "h_w": nrm((dim, dim)),
                "h_b": zeros(dim),
                "proj_w": nrm((dim, dim)),
                "proj_b": zeros(dim),
            }
            blocks.append({
                "norm1_g": ones(dim), "norm1_b": zeros(dim),
                "norm2_g": ones(dim), "norm2_b": zeros(dim),
                "mod": mod,
                "fc1_w": nrm((dim, hidden)), "fc1_b": zeros(hidden),
                "fc2_w": nrm((hidden, dim)), "fc2_b": zeros(dim),
            })
        down = None
        if i < len(cfg["depths"]) - 1:
            down = {
                "w": nrm((2 * 2 * dim, dims[i + 1])),
                "b": zeros(dims[i + 1]),
                "norm_g": ones(dims[i + 1]),
                "norm_b": zeros(dims[i + 1]),
            }
        stages.append({"blocks": blocks, "down": down})
    p["stages"] = stages
    p["norm_g"] = ones(dims[-1])
    p["norm_b"] = zeros(dims[-1])
    return p


# ----------------------------------------------------------------------------
if __name__ == "__main__":
    # small FocalNet: img 16x16, patch 4 -> 4x4 tokens, 2 stages (dims 16, 32)
    cfg = dict(img_size=16, patch_size=4, in_chans=3, embed_dim=16,
               depths=[1, 1], focal_levels=[2, 2], focal_windows=[3, 3],
               focal_factor=2, mlp_ratio=4.0)

    key = jax.random.PRNGKey(0)
    kx, kp = jax.random.split(key)
    x = jax.random.normal(kx, (2, 3, 16, 16), dtype=jnp.float32)  # NCHW like torch
    params = init_params(kp, cfg)

    out = focalnet_forward(x, params, cfg)
    out = jax.block_until_ready(out)
    assert out.shape == (2, 32), out.shape  # (B, num_features)
    assert bool(jnp.all(jnp.isfinite(out)))
    print("KERNEL_OK")
</pallas_src>

<mosaic_0001>
module attributes {stable_mosaic.version = 11 : i64} {
  func.func @_linear_ln_kernel(%arg0: i32, %arg1: memref<32x48xf32, #tpu.memory_space<vmem>>, %arg2: memref<48x16xbf16, #tpu.memory_space<vmem>>, %arg3: memref<1x16xf32, #tpu.memory_space<vmem>>, %arg4: memref<1x16xf32, #tpu.memory_space<vmem>>, %arg5: memref<1x16xf32, #tpu.memory_space<vmem>>, %arg6: memref<32x16xf32, #tpu.memory_space<vmem>>) attributes {dimension_semantics = [#tpu.dimension_semantics<parallel>], iteration_bounds = array<i64: 1>, scalar_prefetch = 0 : i64, scratch_operands = 0 : i64, tpu.core_type = #tpu.core_type<tc>, window_params = [{transform_indices = @transform_0, window_bounds = array<i64: 32, 48>}, {pipeline_mode = #tpu.pipeline_mode<synchronous>, transform_indices = @transform_1, window_bounds = array<i64: 48, 16>}, {pipeline_mode = #tpu.pipeline_mode<synchronous>, transform_indices = @transform_2, window_bounds = array<i64: 1, 16>}, {pipeline_mode = #tpu.pipeline_mode<synchronous>, transform_indices = @transform_3, window_bounds = array<i64: 1, 16>}, {pipeline_mode = #tpu.pipeline_mode<synchronous>, transform_indices = @transform_4, window_bounds = array<i64: 1, 16>}, {transform_indices = @transform_5, window_bounds = array<i64: 32, 16>}]} {
    %c0 = arith.constant 0 : index
    %c0_0 = arith.constant 0 : index
    %0 = vector.load %arg1[%c0, %c0_0] : memref<32x48xf32, #tpu.memory_space<vmem>>, vector<32x48xf32>
    %1 = arith.truncf %0 : vector<32x48xf32> to vector<32x48xbf16>
    %c0_1 = arith.constant 0 : index
    %c0_2 = arith.constant 0 : index
    %2 = vector.load %arg2[%c0_1, %c0_2] : memref<48x16xbf16, #tpu.memory_space<vmem>>, vector<48x16xbf16>
    %cst = arith.constant dense<0.000000e+00> : vector<32x16xf32>
    %3 = tpu.matmul %1, %2, %cst {dimension_numbers = #tpu.dot_dimension_numbers<[1], [0], [0], [1], [0, 0, 1, 1], [], []>} : vector<32x48xbf16>, vector<48x16xbf16>, vector<32x16xf32> -> vector<32x16xf32>
    %c0_3 = arith.constant 0 : index
    %c0_4 = arith.constant 0 : index
    %4 = vector.load %arg3[%c0_3, %c0_4] : memref<1x16xf32, #tpu.memory_space<vmem>>, vector<1x16xf32>
    %5 = vector.broadcast %4 : vector<1x16xf32> to vector<32x16xf32>
    %6 = arith.addf %3, %5 : vector<32x16xf32>
    %c0_5 = arith.constant 0 : index
    %c0_6 = arith.constant 0 : index
    %7 = vector.load %arg4[%c0_5, %c0_6] : memref<1x16xf32, #tpu.memory_space<vmem>>, vector<1x16xf32>
    %c0_7 = arith.constant 0 : index
    %c0_8 = arith.constant 0 : index
    %8 = vector.load %arg5[%c0_7, %c0_8] : memref<1x16xf32, #tpu.memory_space<vmem>>, vector<1x16xf32>
    %cst_9 = arith.constant dense<0.000000e+00> : vector<32xf32>
    %9 = vector.multi_reduction <add>, %6, %cst_9 [1] : vector<32x16xf32> to vector<32xf32>
    %10 = vector.shape_cast %9 : vector<32xf32> to vector<32x1xf32>
    %cst_10 = arith.constant 1.600000e+01 : f32
    %11 = vector.broadcast %cst_10 : f32 to vector<32x1xf32>
    %12 = arith.divf %10, %11 : vector<32x1xf32>
    %13 = vector.broadcast %12 : vector<32x1xf32> to vector<32x16xf32>
    %14 = arith.subf %6, %13 : vector<32x16xf32>
    %15 = arith.mulf %14, %14 : vector<32x16xf32>
    %cst_11 = arith.constant dense<0.000000e+00> : vector<32xf32>
    %16 = vector.multi_reduction <add>, %15, %cst_11 [1] : vector<32x16xf32> to vector<32xf32>
    %17 = vector.shape_cast %16 : vector<32xf32> to vector<32x1xf32>
    %cst_12 = arith.constant 1.600000e+01 : f32
    %18 = vector.broadcast %cst_12 : f32 to vector<32x1xf32>
    %19 = arith.divf %17, %18 : vector<32x1xf32>
    %cst_13 = arith.constant 9.99999974E-6 : f32
    %20 = vector.broadcast %cst_13 : f32 to vector<32x1xf32>
    %21 = arith.addf %19, %20 : vector<32x1xf32>
    %22 = math.rsqrt %21 : vector<32x1xf32>
    %23 = vector.broadcast %22 : vector<32x1xf32> to vector<32x16xf32>
    %24 = arith.mulf %14, %23 : vector<32x16xf32>
    %25 = vector.broadcast %7 : vector<1x16xf32> to vector<32x16xf32>
    %26 = arith.mulf %24, %25 : vector<32x16xf32>
    %27 = vector.broadcast %8 : vector<1x16xf32> to vector<32x16xf32>
    %28 = arith.addf %26, %27 : vector<32x16xf32>
    %c0_14 = arith.constant 0 : index
    %c0_15 = arith.constant 0 : index
    %29 = vector.load %arg6[%c0_14, %c0_15] : memref<32x16xf32, #tpu.memory_space<vmem>>, vector<32x16xf32>
    tpu.vector_store %arg6[%c0_14, %c0_15], %28 {strides = array<i32>} : memref<32x16xf32, #tpu.memory_space<vmem>>, vector<32x16xf32>,
    return
  }
  func.func @transform_0(%arg0: i32) -> (i32, i32) {
    %c0_i32 = arith.constant 0 : i32
    %c0_i32_0 = arith.constant 0 : i32
    return %arg0, %c0_i32 : i32, i32
  }
  func.func @transform_1(%arg0: i32) -> (i32, i32) {
    %c0_i32 = arith.constant 0 : i32
    %c0_i32_0 = arith.constant 0 : i32
    %c0_i32_1 = arith.constant 0 : i32
    return %c0_i32, %c0_i32_0 : i32, i32
  }
  func.func @transform_2(%arg0: i32) -> (i32, i32) {
    %c0_i32 = arith.constant 0 : i32
    %c0_i32_0 = arith.constant 0 : i32
    %c0_i32_1 = arith.constant 0 : i32
    return %c0_i32, %c0_i32_0 : i32, i32
  }
  func.func @transform_3(%arg0: i32) -> (i32, i32) {
    %c0_i32 = arith.constant 0 : i32
    %c0_i32_0 = arith.constant 0 : i32
    %c0_i32_1 = arith.constant 0 : i32
    return %c0_i32, %c0_i32_0 : i32, i32
  }
  func.func @transform_4(%arg0: i32) -> (i32, i32) {
    %c0_i32 = arith.constant 0 : i32
    %c0_i32_0 = arith.constant 0 : i32
    %c0_i32_1 = arith.constant 0 : i32
    return %c0_i32, %c0_i32_0 : i32, i32
  }
  func.func @transform_5(%arg0: i32) -> (i32, i32) {
    %c0_i32 = arith.constant 0 : i32
    %c0_i32_0 = arith.constant 0 : i32
    return %arg0, %c0_i32 : i32, i32
  }
}

</mosaic_0001>

<llo_original>
// kernel: tpu_custom_call.1
$region0: #{tpu_custom_call.1}
  #allocation0 [shape = 'u32[]', space=smem, size = 0x4, offset = 0x4, fixed_abs, tag = 'smem constant byte address 0x4 - core index']
  #allocation1 [shape = 'u32[72,128]{1,0:T(1,128)}', space=vmem, size = 0x9000, scoped, tag = 'internal scratch']
  %s0 = inlined_call_operand.vmem [shape: f32[32,48], index: 0, kind: input, shape index: {}]
  %s1 = inlined_call_operand.vmem [shape: bf16[48,16], index: 1, kind: input, shape index: {}]
  %s2 = inlined_call_operand.vmem [shape: f32[1,16], index: 2, kind: input, shape index: {}]
  %s3 = inlined_call_operand.vmem [shape: f32[1,16], index: 3, kind: input, shape index: {}]
  %s4 = inlined_call_operand.vmem [shape: f32[1,16], index: 4, kind: input, shape index: {}]
  %s5 = inlined_call_operand.vmem [shape: f32[32,16], index: 5, kind: output, shape index: {}]
  %s6 = sld [smem:[#allocation0]]
  $region30: #{tpu_custom_call.1} parent=0
    _
  %s8 = ssub.s32 1, %s6
  %s9 = scalar_select 0, %s8, %s6
  // Predicated region
  $region2: #{tpu_custom_call.1} parent=0 // pred_check
    _
  $region3: #{tpu_custom_call.1} parent=0 // pred_check_branch
    %11 = sbr.rel (0) target = $region5
  $region4: #{tpu_custom_call.1} parent=0 // pred_region
    _
  $region5: #{tpu_custom_call.1} parent=0 // pred_fallthru
    _
  // Predicated region
  $region6: #{tpu_custom_call.1} parent=0 // pred_check
    _
  $region7: #{tpu_custom_call.1} parent=0 // pred_check_branch
    %13 = sbr.rel (0) target = $region9
  $region8: #{tpu_custom_call.1} parent=0 // pred_region
    _
  $region9: #{tpu_custom_call.1} parent=0 // pred_fallthru
    _
  // Predicated region
  $region10: #{tpu_custom_call.1} parent=0 // pred_check
    _
  $region11: #{tpu_custom_call.1} parent=0 // pred_check_branch
    %15 = sbr.rel (0) target = $region13
  $region12: #{tpu_custom_call.1} parent=0 // pred_region
    _
  $region13: #{tpu_custom_call.1} parent=0 // pred_fallthru
    _
  // Predicated region
  $region14: #{tpu_custom_call.1} parent=0 // pred_check
    _
  $region15: #{tpu_custom_call.1} parent=0 // pred_check_branch
    %17 = sbr.rel (0) target = $region17
  $region16: #{tpu_custom_call.1} parent=0 // pred_region
    _
  $region17: #{tpu_custom_call.1} parent=0 // pred_fallthru
    _
  // Predicated region
  $region18: #{tpu_custom_call.1} parent=0 // pred_check
    _
  $region19: #{tpu_custom_call.1} parent=0 // pred_check_branch
    %19 = sbr.rel (0) target = $region21
  $region20: #{tpu_custom_call.1} parent=0 // pred_region
    _
  $region21: #{tpu_custom_call.1} parent=0 // pred_fallthru
    _
  %v21 = vld [vmem:[%s0] sm:$0xff]
  %v22 = vld [vmem:[%s0 + $0x8] sm:$0xff]
  %v23 = vld [vmem:[%s0 + $0x10] sm:$0xff]
  %v24 = vld [vmem:[%s0 + $0x18] sm:$0xff]
  %v25 = vpack.c.bf16 %v22, %v21
  %v26 = vpack.c.bf16 %v24, %v23
  %v27 = vld [vmem:[%s1] sm:$0xf]
  %v28 = vld [vmem:[%s1 + $0x4] sm:$0xf]
  %v29 = vld [vmem:[%s1 + $0x8] sm:$0xf]
  %v30 = vld [vmem:[%s1 + $0xc] sm:$0xf]
  %v31 = vld [vmem:[%s1 + $0x10] sm:$0xf]
  %v32 = vld [vmem:[%s1 + $0x14] sm:$0xf]
  %v33 = vld [vmem:[%s2] sm:$0x1]
  %v35 = vperm.slane %v33, 0
  %v43 = vunpack.c.l.b16 %v27
  %v44 = vunpack.c.l.b16 %v28
  %v45 = vunpack.c.l.b16 %v29
  %v46 = vunpack.c.l.b16 %v30
  %v47 = vunpack.c.l.b16 %v31
  %v48 = vunpack.c.l.b16 %v32
  %v49 = vpack.c.b16 %v44, %v43
  %v50 = vpack.c.b16 %v46, %v45
  %v51 = vpack.c.b16 %v48, %v47
  %vm55 = vcmask 392192
  %v57 = vsel %vm55, %v25, 0
  %v60 = vsel %vm55, %v26, 0
  %62 = vmatpush.bf16.msra.mxu0 0
  %63 = vmatpush.bf16.msra.mxu0 0
  %64 = vmatpush.bf16.msra.mxu0 0
  %65 = vmatpush.bf16.msra.mxu0 0
  %66 = vmatpush.bf16.msra.mxu0 0
  %67 = vmatpush.bf16.msra.mxu0 %v51
  %68 = vmatpush.bf16.msra.mxu0 %v50
  %69 = vmatpush.bf16.msra.mxu0 %v49
  %70 = vmatmul.bf16.gmra.mxu0 %v57
  %v71 = vpop.f32.mrf.mxu0
  %v72 = vadd.f32 %v35, %v71
  %v73 = vpop.f32.mrf.mxu0
  %v74 = vadd.f32 %v35, %v73
  %75 = vmatmul.bf16.gmra.mxu0 %v60
  %v76 = vpop.f32.mrf.mxu0
  %v77 = vadd.f32 %v35, %v76
  %v78 = vpop.f32.mrf.mxu0
  %v79 = vadd.f32 %v35, %v78
  %80 = vdwg.mxu0
  %v81 = vld [vmem:[%s3] sm:$0x1]
  %v82 = vld [vmem:[%s4] sm:$0x1]
  %vm83 = vcmask 130048
  %v84 = vsel %vm83, %v72, 0.0
  %85 = vadd.xlane.f32.xlu0 %v84
  %v86 = vpop.xlane.xlu0 %85
  %v87 = vsel %vm83, %v74, 0.0
  %88 = vadd.xlane.f32.xlu0 %v87
  %v89 = vpop.xlane.xlu0 %88
  %v90 = vsel %vm83, %v77, 0.0
  %91 = vadd.xlane.f32.xlu0 %v90
  %v92 = vpop.xlane.xlu0 %91
  %v93 = vsel %vm83, %v79, 0.0
  %94 = vadd.xlane.f32.xlu0 %v93
  %v95 = vpop.xlane.xlu0 %94
  %v96 = vrcp.pop 16.0
  %v97 = vmul.f32 16.0, %v96
  %v98 = vsub.f32 1.0, %v97
  %v99 = vmul.f32 %v96, %v98
  %v100 = vadd.f32 %v96, %v99
  %vm101 = vweird.f32 %v96
  %v102 = vsel %vm101, %v96, %v100
  %v103 = vmul.f32 %v86, %v102
  %v104 = vmul.f32 %v89, %v102
  %v105 = vmul.f32 %v92, %v102
  %v106 = vmul.f32 %v95, %v102
  %v107 = vsub.f32 %v72, %v103
  %v108 = vsub.f32 %v74, %v104
  %v109 = vsub.f32 %v77, %v105
  %v110 = vsub.f32 %v79, %v106
  %v111 = vmul.f32 %v107, %v107
  %v112 = vmul.f32 %v108, %v108
  %v113 = vmul.f32 %v109, %v109
  %v114 = vmul.f32 %v110, %v110
  %v115 = vsel %vm83, %v111, 0.0
  %116 = vadd.xlane.f32.xlu0 %v115
  %v117 = vpop.xlane.xlu0 %116
  %v118 = vsel %vm83, %v112, 0.0
  %119 = vadd.xlane.f32.xlu0 %v118
  %v120 = vpop.xlane.xlu0 %119
  %v121 = vsel %vm83, %v113, 0.0
  %122 = vadd.xlane.f32.xlu0 %v121
  %v123 = vpop.xlane.xlu0 %122
  %v124 = vsel %vm83, %v114, 0.0
  %125 = vadd.xlane.f32.xlu0 %v124
  %v126 = vpop.xlane.xlu0 %125
  %v127 = vmul.f32 %v117, %v102
  %v128 = vmul.f32 %v120, %v102
  %v129 = vmul.f32 %v123, %v102
  %v130 = vmul.f32 %v126, %v102
  %v131 = vadd.f32 %v127, 1e-05
  %v132 = vadd.f32 %v128, 1e-05
  %v133 = vadd.f32 %v129, 1e-05
  %v134 = vadd.f32 %v130, 1e-05
  %v135 = vrsqrt.pop %v131
  %v136 = vmul.f32 %v135, %v131
  %v137 = vmul.f32 %v136, %v135
  %v138 = vmul.f32 0.5, %v137
  %v139 = vsub.f32 1.5, %v138
  %v140 = vmul.f32 %v135, %v139
  %vm141 = vweird.f32 %v131
  %vm142 = vweird.f32 %v135
  %vm143 = vmor %vm141, %vm142
  %v144 = vsel %vm143, %v135, %v140
  %v145 = vrsqrt.pop %v132
  %v146 = vmul.f32 %v145, %v132
  %v147 = vmul.f32 %v146, %v145
  %v148 = vmul.f32 0.5, %v147
  %v149 = vsub.f32 1.5, %v148
  %v150 = vmul.f32 %v145, %v149
  %vm151 = vweird.f32 %v132
  %vm152 = vweird.f32 %v145
  %vm153 = vmor %vm151, %vm152
  %v154 = vsel %vm153, %v145, %v150
  %v155 = vrsqrt.pop %v133
  %v156 = vmul.f32 %v155, %v133
  %v157 = vmul.f32 %v156, %v155
  %v158 = vmul.f32 0.5, %v157
  %v159 = vsub.f32 1.5, %v158
  %v160 = vmul.f32 %v155, %v159
  %vm161 = vweird.f32 %v133
  %vm162 = vweird.f32 %v155
  %vm163 = vmor %vm161, %vm162
  %v164 = vsel %vm163, %v155, %v160
  %v165 = vrsqrt.pop %v134
  %v166 = vmul.f32 %v165, %v134
  %v167 = vmul.f32 %v166, %v165
  %v168 = vmul.f32 0.5, %v167
  %v169 = vsub.f32 1.5, %v168
  %v170 = vmul.f32 %v165, %v169
  %vm171 = vweird.f32 %v134
  %vm172 = vweird.f32 %v165
  %vm173 = vmor %vm171, %vm172
  %v174 = vsel %vm173, %v165, %v170
  %v175 = vmul.f32 %v107, %v144
  %v176 = vmul.f32 %v108, %v154
  %v177 = vmul.f32 %v109, %v164
  %v178 = vmul.f32 %v110, %v174
  %v180 = vperm.slane %v81, 0
  %v182 = vmul.f32 %v175, %v180
  %v183 = vmul.f32 %v176, %v180
  %v184 = vmul.f32 %v177, %v180
  %v185 = vmul.f32 %v178, %v180
  %v187 = vperm.slane %v82, 0
  %v189 = vadd.f32 %v182, %v187
  %v190 = vadd.f32 %v183, %v187
  %v191 = vadd.f32 %v184, %v187
  %v192 = vadd.f32 %v185, %v187
  %193 = vst.msk [vmem:[%s5] sm:$0xff] %vm83, %v189
  %194 = vst.msk [vmem:[%s5 + $0x8] sm:$0xff] %vm83, %v190
  %195 = vst.msk [vmem:[%s5 + $0x10] sm:$0xff] %vm83, %v191
  %196 = vst.msk [vmem:[%s5 + $0x18] sm:$0xff] %vm83, %v192
  // Predicated region
  $region22: #{tpu_custom_call.1} parent=0 // pred_check
    _
  $region23: #{tpu_custom_call.1} parent=0 // pred_check_branch
    %198 = sbr.rel (0) target = $region25
  $region24: #{tpu_custom_call.1} parent=0 // pred_region
    _
  $region25: #{tpu_custom_call.1} parent=0 // pred_fallthru
    _
  // Predicated region
  $region26: #{tpu_custom_call.1} parent=0 // pred_check
    _
  $region27: #{tpu_custom_call.1} parent=0 // pred_check_branch
    %200 = sbr.rel (0) target = $region29
  $region28: #{tpu_custom_call.1} parent=0 // pred_region
    _
  $region29: #{tpu_custom_call.1} parent=0 // pred_fallthru
    _

</llo_original>
